<compile_context>
chip_gen: v7x
topology: tpu7x:2x2x1
jax: 0.10.0
libtpu: 0.0.40
codegen_flags: <defaults>
</compile_context>

<pallas_src>
import jax
import jax.numpy as jnp
from jax.experimental import pallas as pl
from jax.experimental.pallas import tpu as pltpu

H1, H2, OUT = 16, 4, 2


def _round_up(x, m):
    return (x + m - 1) // m * m


def _vmem_capacity_bytes():
    try:
        return int(pltpu.get_tpu_info().vmem_capacity_bytes)
    except Exception:
        return 64 << 20  # conservative fallback: v7x per-TensorCore VMEM


def _choose_batch_tile(batch, block_rows):
    """Batch-tile rows: multiple of 8, ~block_rows, and >=2 tiles when possible."""
    if batch <= 8:
        return batch  # single tile equal to the full (tiny) batch dim -> legal block
    n_tiles = max(2, pl.cdiv(batch, block_rows))
    return _round_up(pl.cdiv(batch, n_tiles), 8)


def fnn_kernel(x_ref, w1_ref, b1_ref, w2_ref, b2_ref, w3_ref, b3_ref, o_ref):
    # x tile: (tb, in) f32. Matmul operands are cast to bf16 in-kernel (MXU),
    # accumulation is f32, bias-add / ReLU stay f32.
    x = x_ref[...].astype(jnp.bfloat16)

    # Layer 1: Linear(input_size, 16) + ReLU
    h1 = jnp.dot(x, w1_ref[...].astype(jnp.bfloat16),
                 preferred_element_type=jnp.float32) + b1_ref[...]
    h1 = jnp.maximum(h1, 0.0).astype(jnp.bfloat16)

    # Layer 2: Linear(16, 4) + ReLU
    h2 = jnp.dot(h1, w2_ref[...].astype(jnp.bfloat16),
                 preferred_element_type=jnp.float32) + b2_ref[...]
    h2 = jnp.maximum(h2, 0.0).astype(jnp.bfloat16)

    # Layer 3: Linear(4, 2) -- un-padded 2 output columns, f32 store
    out = jnp.dot(h2, w3_ref[...].astype(jnp.bfloat16),
                  preferred_element_type=jnp.float32) + b3_ref[...]
    o_ref[...] = out.astype(o_ref.dtype)


def fnn_forward(x, params, *, block_rows=8192):
    """x: (B, input_size) float32. params: dict of f32 weights/biases (no prepack needed)."""
    w1, b1 = params["w1"], params["b1"]
    w2, b2 = params["w2"], params["b2"]
    w3, b3 = params["w3"], params["b3"]

    B, in_dim = x.shape
    out_dim = w3.shape[1]

    tb = _choose_batch_tile(B, block_rows)
    grid = (pl.cdiv(B, tb),)

    # VMEM budget: double-buffered x/out tiles + resident f32 weights, 4x headroom,
    # capped well below the per-core VMEM capacity (v7x has only 64 MiB/TC).
    weight_bytes = 4 * (w1.size + b1.size + w2.size + b2.size + w3.size + b3.size)
    tile_bytes = 2 * (tb * in_dim * 4) + 2 * (tb * out_dim * 4)
    need = tile_bytes + 2 * weight_bytes
    cap = _vmem_capacity_bytes()
    upper_cap = max(8 << 20, min(40 << 20, cap // 2), 2 * need)
    vmem_bytes = int(min(max(4 * need, 8 << 20), upper_cap))

    cost = pl.CostEstimate(
        flops=2 * B * (in_dim * H1 + H1 * H2 + H2 * OUT),
        transcendentals=0,
        bytes_accessed=B * in_dim * 4 + weight_bytes + B * out_dim * 4,
    )

    in_specs = [
        pl.BlockSpec((tb, in_dim), lambda i: (i, 0)),   # x: streamed per batch tile
        pl.BlockSpec((in_dim, H1), lambda i: (0, 0)),   # weights/biases: resident
        pl.BlockSpec((1, H1), lambda i: (0, 0)),
        pl.BlockSpec((H1, H2), lambda i: (0, 0)),
        pl.BlockSpec((1, H2), lambda i: (0, 0)),
        pl.BlockSpec((H2, out_dim), lambda i: (0, 0)),
        pl.BlockSpec((1, out_dim), lambda i: (0, 0)),
    ]
    out_specs = pl.BlockSpec((tb, out_dim), lambda i: (i, 0))

    return pl.pallas_call(
        fnn_kernel,
        out_shape=jax.ShapeDtypeStruct((B, out_dim), jnp.float32),
        grid=grid,
        in_specs=in_specs,
        out_specs=out_specs,
        compiler_params=pltpu.CompilerParams(
            dimension_semantics=("parallel",),
            vmem_limit_bytes=vmem_bytes,
        ),
        cost_estimate=cost,
    )(x, w1, b1, w2, b2, w3, b3)


def init_params(key, input_size):
    """Deterministic init matching nn.Linear shapes (stored transposed: (in, out))."""
    ks = jax.random.split(key, 6)

    def linear_init(kw, kb, fan_in, fan_out):
        bound = 1.0 / jnp.sqrt(fan_in)
        w = jax.random.uniform(kw, (fan_in, fan_out), jnp.float32, -bound, bound)
        b = jax.random.uniform(kb, (1, fan_out), jnp.float32, -bound, bound)
        return w, b

    w1, b1 = linear_init(ks[0], ks[1], input_size, H1)
    w2, b2 = linear_init(ks[2], ks[3], H1, H2)
    w3, b3 = linear_init(ks[4], ks[5], H2, OUT)
    return {"w1": w1, "b1": b1, "w2": w2, "b2": b2, "w3": w3, "b3": b3}


def fnn_reference(x, p):
    """Reference matching the kernel's bf16-matmul / f32-accumulate numerics."""
    xb = x.astype(jnp.bfloat16)
    h1 = jnp.maximum(jnp.dot(xb, p["w1"].astype(jnp.bfloat16),
                             preferred_element_type=jnp.float32) + p["b1"], 0.0)
    h1 = h1.astype(jnp.bfloat16)
    h2 = jnp.maximum(jnp.dot(h1, p["w2"].astype(jnp.bfloat16),
                             preferred_element_type=jnp.float32) + p["b2"], 0.0)
    h2 = h2.astype(jnp.bfloat16)
    return jnp.dot(h2, p["w3"].astype(jnp.bfloat16),
                   preferred_element_type=jnp.float32) + p["b3"]


if __name__ == "__main__":
    key = jax.random.PRNGKey(0)
    k_x, k_p = jax.random.split(key)

    batch = 20          # not a multiple of the 16-row tile -> exercises ragged tail block
    input_size = 32

    x = jax.random.normal(k_x, (batch, input_size), dtype=jnp.float32)
    params = init_params(k_p, input_size)

    out = fnn_forward(x, params)
    out = jax.block_until_ready(out)

    ref = fnn_reference(x, params)
    assert out.shape == (batch, 2), out.shape
    assert jnp.allclose(out, ref, atol=1e-3, rtol=1e-3), "mismatch vs reference"

    print("KERNEL_OK")
</pallas_src>

<mosaic_0001>
module attributes {stable_mosaic.version = 11 : i64} {
  func.func @fnn_kernel(%arg0: i32, %arg1: memref<16x32xf32, #tpu.memory_space<vmem>>, %arg2: memref<32x16xf32, #tpu.memory_space<vmem>>, %arg3: memref<1x16xf32, #tpu.memory_space<vmem>>, %arg4: memref<16x4xf32, #tpu.memory_space<vmem>>, %arg5: memref<1x4xf32, #tpu.memory_space<vmem>>, %arg6: memref<4x2xf32, #tpu.memory_space<vmem>>, %arg7: memref<1x2xf32, #tpu.memory_space<vmem>>, %arg8: memref<16x2xf32, #tpu.memory_space<vmem>>) attributes {dimension_semantics = [#tpu.dimension_semantics<parallel>], iteration_bounds = array<i64: 2>, scalar_prefetch = 0 : i64, scratch_operands = 0 : i64, tpu.core_type = #tpu.core_type<tc>, window_params = [{transform_indices = @transform_0, window_bounds = array<i64: 16, 32>}, {pipeline_mode = #tpu.pipeline_mode<synchronous>, transform_indices = @transform_1, window_bounds = array<i64: 32, 16>}, {pipeline_mode = #tpu.pipeline_mode<synchronous>, transform_indices = @transform_2, window_bounds = array<i64: 1, 16>}, {pipeline_mode = #tpu.pipeline_mode<synchronous>, transform_indices = @transform_3, window_bounds = array<i64: 16, 4>}, {pipeline_mode = #tpu.pipeline_mode<synchronous>, transform_indices = @transform_4, window_bounds = array<i64: 1, 4>}, {pipeline_mode = #tpu.pipeline_mode<synchronous>, transform_indices = @transform_5, window_bounds = array<i64: 4, 2>}, {pipeline_mode = #tpu.pipeline_mode<synchronous>, transform_indices = @transform_6, window_bounds = array<i64: 1, 2>}, {transform_indices = @transform_7, window_bounds = array<i64: 16, 2>}]} {
    %c0 = arith.constant 0 : index
    %c0_0 = arith.constant 0 : index
    %0 = vector.load %arg1[%c0, %c0_0] : memref<16x32xf32, #tpu.memory_space<vmem>>, vector<16x32xf32>
    %1 = arith.truncf %0 : vector<16x32xf32> to vector<16x32xbf16>
    %c0_1 = arith.constant 0 : index
    %c0_2 = arith.constant 0 : index
    %2 = vector.load %arg2[%c0_1, %c0_2] : memref<32x16xf32, #tpu.memory_space<vmem>>, vector<32x16xf32>
    %3 = arith.truncf %2 : vector<32x16xf32> to vector<32x16xbf16>
    %cst = arith.constant dense<0.000000e+00> : vector<16x16xf32>
    %4 = tpu.matmul %1, %3, %cst {dimension_numbers = #tpu.dot_dimension_numbers<[1], [0], [0], [1], [0, 0, 1, 1], [], []>} : vector<16x32xbf16>, vector<32x16xbf16>, vector<16x16xf32> -> vector<16x16xf32>
    %c0_3 = arith.constant 0 : index
    %c0_4 = arith.constant 0 : index
    %5 = vector.load %arg3[%c0_3, %c0_4] : memref<1x16xf32, #tpu.memory_space<vmem>>, vector<1x16xf32>
    %6 = vector.broadcast %5 : vector<1x16xf32> to vector<16x16xf32>
    %7 = arith.addf %4, %6 : vector<16x16xf32>
    %cst_5 = arith.constant 0.000000e+00 : f32
    %8 = vector.broadcast %cst_5 : f32 to vector<16x16xf32>
    %9 = arith.maximumf %7, %8 : vector<16x16xf32>
    %10 = arith.truncf %9 : vector<16x16xf32> to vector<16x16xbf16>
    %c0_6 = arith.constant 0 : index
    %c0_7 = arith.constant 0 : index
    %11 = vector.load %arg4[%c0_6, %c0_7] : memref<16x4xf32, #tpu.memory_space<vmem>>, vector<16x4xf32>
    %12 = arith.truncf %11 : vector<16x4xf32> to vector<16x4xbf16>
    %cst_8 = arith.constant dense<0.000000e+00> : vector<16x4xf32>
    %13 = tpu.matmul %10, %12, %cst_8 {dimension_numbers = #tpu.dot_dimension_numbers<[1], [0], [0], [1], [0, 0, 1, 1], [], []>} : vector<16x16xbf16>, vector<16x4xbf16>, vector<16x4xf32> -> vector<16x4xf32>
    %c0_9 = arith.constant 0 : index
    %c0_10 = arith.constant 0 : index
    %14 = vector.load %arg5[%c0_9, %c0_10] : memref<1x4xf32, #tpu.memory_space<vmem>>, vector<1x4xf32>
    %15 = vector.broadcast %14 : vector<1x4xf32> to vector<16x4xf32>
    %16 = arith.addf %13, %15 : vector<16x4xf32>
    %cst_11 = arith.constant 0.000000e+00 : f32
    %17 = vector.broadcast %cst_11 : f32 to vector<16x4xf32>
    %18 = arith.maximumf %16, %17 : vector<16x4xf32>
    %19 = arith.truncf %18 : vector<16x4xf32> to vector<16x4xbf16>
    %c0_12 = arith.constant 0 : index
    %c0_13 = arith.constant 0 : index
    %20 = vector.load %arg6[%c0_12, %c0_13] : memref<4x2xf32, #tpu.memory_space<vmem>>, vector<4x2xf32>
    %21 = arith.truncf %20 : vector<4x2xf32> to vector<4x2xbf16>
    %cst_14 = arith.constant dense<0.000000e+00> : vector<16x2xf32>
    %22 = tpu.matmul %19, %21, %cst_14 {dimension_numbers = #tpu.dot_dimension_numbers<[1], [0], [0], [1], [0, 0, 1, 1], [], []>} : vector<16x4xbf16>, vector<4x2xbf16>, vector<16x2xf32> -> vector<16x2xf32>
    %c0_15 = arith.constant 0 : index
    %c0_16 = arith.constant 0 : index
    %23 = vector.load %arg7[%c0_15, %c0_16] : memref<1x2xf32, #tpu.memory_space<vmem>>, vector<1x2xf32>
    %24 = vector.broadcast %23 : vector<1x2xf32> to vector<16x2xf32>
    %25 = arith.addf %22, %24 : vector<16x2xf32>
    %c0_17 = arith.constant 0 : index
    %c0_18 = arith.constant 0 : index
    %26 = vector.load %arg8[%c0_17, %c0_18] : memref<16x2xf32, #tpu.memory_space<vmem>>, vector<16x2xf32>
    tpu.vector_store %arg8[%c0_17, %c0_18], %25 {strides = array<i32>} : memref<16x2xf32, #tpu.memory_space<vmem>>, vector<16x2xf32>,
    return
  }
  func.func @transform_0(%arg0: i32) -> (i32, i32) {
    %c0_i32 = arith.constant 0 : i32
    %c0_i32_0 = arith.constant 0 : i32
    return %arg0, %c0_i32 : i32, i32
  }
  func.func @transform_1(%arg0: i32) -> (i32, i32) {
    %c0_i32 = arith.constant 0 : i32
    %c0_i32_0 = arith.constant 0 : i32
    %c0_i32_1 = arith.constant 0 : i32
    return %c0_i32, %c0_i32_0 : i32, i32
  }
  func.func @transform_2(%arg0: i32) -> (i32, i32) {
    %c0_i32 = arith.constant 0 : i32
    %c0_i32_0 = arith.constant 0 : i32
    %c0_i32_1 = arith.constant 0 : i32
    return %c0_i32, %c0_i32_0 : i32, i32
  }
  func.func @transform_3(%arg0: i32) -> (i32, i32) {
    %c0_i32 = arith.constant 0 : i32
    %c0_i32_0 = arith.constant 0 : i32
    %c0_i32_1 = arith.constant 0 : i32
    return %c0_i32, %c0_i32_0 : i32, i32
  }
  func.func @transform_4(%arg0: i32) -> (i32, i32) {
    %c0_i32 = arith.constant 0 : i32
    %c0_i32_0 = arith.constant 0 : i32
    %c0_i32_1 = arith.constant 0 : i32
    return %c0_i32, %c0_i32_0 : i32, i32
  }
  func.func @transform_5(%arg0: i32) -> (i32, i32) {
    %c0_i32 = arith.constant 0 : i32
    %c0_i32_0 = arith.constant 0 : i32
    %c0_i32_1 = arith.constant 0 : i32
    return %c0_i32, %c0_i32_0 : i32, i32
  }
  func.func @transform_6(%arg0: i32) -> (i32, i32) {
    %c0_i32 = arith.constant 0 : i32
    %c0_i32_0 = arith.constant 0 : i32
    %c0_i32_1 = arith.constant 0 : i32
    return %c0_i32, %c0_i32_0 : i32, i32
  }
  func.func @transform_7(%arg0: i32) -> (i32, i32) {
    %c0_i32 = arith.constant 0 : i32
    %c0_i32_0 = arith.constant 0 : i32
    return %arg0, %c0_i32 : i32, i32
  }
}

</mosaic_0001>

<llo_original>
// kernel: tpu_custom_call.1
$region0: #{tpu_custom_call.1}
  #allocation0 [shape = 'u32[]', space=smem, size = 0x4, offset = 0x4, fixed_abs, tag = 'smem constant byte address 0x4 - core index']
  #allocation1 [shape = 'u32[144,128]{1,0:T(1,128)}', space=vmem, size = 0x12000, scoped, tag = 'internal scratch']
  %s0 = inlined_call_operand.vmem [shape: f32[20,32], index: 0, kind: input, shape index: {}]
  %s1 = inlined_call_operand.vmem [shape: f32[32,16], index: 1, kind: input, shape index: {}]
  %s2 = inlined_call_operand.vmem [shape: f32[1,16], index: 2, kind: input, shape index: {}]
  %s3 = inlined_call_operand.vmem [shape: f32[16,4], index: 3, kind: input, shape index: {}]
  %s4 = inlined_call_operand.vmem [shape: f32[1,4], index: 4, kind: input, shape index: {}]
  %s5 = inlined_call_operand.vmem [shape: f32[4,2], index: 5, kind: input, shape index: {}]
  %s6 = inlined_call_operand.vmem [shape: f32[1,2], index: 6, kind: input, shape index: {}]
  %s7 = inlined_call_operand.vmem [shape: f32[20,2], index: 7, kind: output, shape index: {}]
  %s8 = sld [smem:[#allocation0]]
  $region109: #{tpu_custom_call.1} parent=0
    _
  %s10 = ssub.s32 1, %s8
  %s11 = scalar_select 0, %s10, %s8
  $region1: #{tpu_custom_call.1} parent=0
    #allocation2 [shape = 'u8[16384]{0}', space=vmem, size = 0x4000, scoped, tag = 'output window, operand 0']
    loop: start=0, step=1, limit=4
    $region2: #{tpu_custom_call.1} parent=1 // loop_pre_header
      _
    $region3: #{tpu_custom_call.1} parent=1 // loop_header
      %s13 = sphi 0, %s17
      %p14 = scmp.ge.s32.totalorder %s13, 4
      %s23 = sphi 0, %s25
      %s26 = sphi 0, %s23
      %s27 = sphi 0, %s26
      %s43 = sphi 0, %s27
      %s47 = sphi 0, %s47
      %s49 = sphi 0, %s47
      %s50 = sphi 0, %s49
      %s64 = sphi 0, %s50
      %s68 = sphi 0, %s68
      %s70 = sphi 0, %s68
      %s71 = sphi 0, %s70
      %s85 = sphi 0, %s71
      %s89 = sphi 0, %s89
      %s91 = sphi 0, %s89
      %s92 = sphi 0, %s91
      %s106 = sphi 0, %s92
      %s110 = sphi 0, %s110
      %s112 = sphi 0, %s110
      %s113 = sphi 0, %s112
      %s127 = sphi 0, %s113
      %s131 = sphi 0, %s131
      %s133 = sphi 0, %s131
      %s134 = sphi 0, %s133
      %s148 = sphi 0, %s134
      %s152 = sphi 0, %s152
      %s154 = sphi 0, %s152
      %s155 = sphi 0, %s154
      %s169 = sphi 0, %s155
      %s175 = sphi 0, %s177
      %s178 = sphi 0, %s175
      %s179 = sphi 0, %s178
      %s195 = sphi 0, %s179
    $region4: #{tpu_custom_call.1} parent=1 // loop_header_branch
      %16 = sbr.rel (%p14) target = $region8
    $region5: #{tpu_custom_call.1} parent=1 // loop_body
      %s18 = ssub.s32 %s13, 1
      %s19 = ssub.s32 %s13, 2
      %s20 = sadd.s32 %s13, 1
      %s21 = ssub.s32 %s13, %s20
      %p22 = scmp.eq.s32.totalorder %s21, 0
      %s24 = sadd.s32 %s23, 1
      %s25 = scalar_select %p22, %s23, %s24
      %p28 = pneg %p22
      %p29 = scmp.eq.s32.totalorder %s13, 1
      %p30 = por %p28, %p29
      %p31 = scmp.ne.s32.totalorder %s23, %s26
      %p32 = scmp.eq.s32.totalorder %s13, 0
      %p33 = por %p31, %p32
      %p34 = scmp.ne.s32.totalorder %s23, %s26
      %p35 = scmp.eq.s32.totalorder %s18, 1
      %p36 = por %p34, %p35
      %p37 = scmp.ne.s32.totalorder %s26, %s27
      %p38 = scmp.eq.s32.totalorder %s18, 0
      %p39 = por %p37, %p38
      %p40 = scmp.ne.s32.totalorder %s26, %s27
      %p41 = scmp.eq.s32.totalorder %s19, 1
      %p42 = por %p40, %p41
      %p44 = scmp.ne.s32.totalorder %s27, %s43
      %p45 = scmp.eq.s32.totalorder %s19, 0
      %p46 = por %p44, %p45
      %s48 = sadd.s32 %s47, 1
      %p51 = scmp.eq.s32.totalorder %s13, 1
      %p52 = scmp.ne.s32.totalorder %s47, %s49
      %p53 = scmp.eq.s32.totalorder %s13, 0
      %p54 = por %p52, %p53
      %p55 = scmp.ne.s32.totalorder %s47, %s49
      %p56 = scmp.eq.s32.totalorder %s18, 1
      %p57 = por %p55, %p56
      %p58 = scmp.ne.s32.totalorder %s49, %s50
      %p59 = scmp.eq.s32.totalorder %s18, 0
      %p60 = por %p58, %p59
      %p61 = scmp.ne.s32.totalorder %s49, %s50
      %p62 = scmp.eq.s32.totalorder %s19, 1
      %p63 = por %p61, %p62
      %p65 = scmp.ne.s32.totalorder %s50, %s64
      %p66 = scmp.eq.s32.totalorder %s19, 0
      %p67 = por %p65, %p66
      %s69 = sadd.s32 %s68, 1
      %p72 = scmp.eq.s32.totalorder %s13, 1
      %p73 = scmp.ne.s32.totalorder %s68, %s70
      %p74 = scmp.eq.s32.totalorder %s13, 0
      %p75 = por %p73, %p74
      %p76 = scmp.ne.s32.totalorder %s68, %s70
      %p77 = scmp.eq.s32.totalorder %s18, 1
      %p78 = por %p76, %p77
      %p79 = scmp.ne.s32.totalorder %s70, %s71
      %p80 = scmp.eq.s32.totalorder %s18, 0
      %p81 = por %p79, %p80
      %p82 = scmp.ne.s32.totalorder %s70, %s71
      %p83 = scmp.eq.s32.totalorder %s19, 1
      %p84 = por %p82, %p83
      %p86 = scmp.ne.s32.totalorder %s71, %s85
      %p87 = scmp.eq.s32.totalorder %s19, 0
      %p88 = por %p86, %p87
      %s90 = sadd.s32 %s89, 1
      %p93 = scmp.eq.s32.totalorder %s13, 1
      %p94 = scmp.ne.s32.totalorder %s89, %s91
      %p95 = scmp.eq.s32.totalorder %s13, 0
      %p96 = por %p94, %p95
      %p97 = scmp.ne.s32.totalorder %s89, %s91
      %p98 = scmp.eq.s32.totalorder %s18, 1
      %p99 = por %p97, %p98
      %p100 = scmp.ne.s32.totalorder %s91, %s92
      %p101 = scmp.eq.s32.totalorder %s18, 0
      %p102 = por %p100, %p101
      %p103 = scmp.ne.s32.totalorder %s91, %s92
      %p104 = scmp.eq.s32.totalorder %s19, 1
      %p105 = por %p103, %p104
      %p107 = scmp.ne.s32.totalorder %s92, %s106
      %p108 = scmp.eq.s32.totalorder %s19, 0
      %p109 = por %p107, %p108
      %s111 = sadd.s32 %s110, 1
      %p114 = scmp.eq.s32.totalorder %s13, 1
      %p115 = scmp.ne.s32.totalorder %s110, %s112
      %p116 = scmp.eq.s32.totalorder %s13, 0
      %p117 = por %p115, %p116
      %p118 = scmp.ne.s32.totalorder %s110, %s112
      %p119 = scmp.eq.s32.totalorder %s18, 1
      %p120 = por %p118, %p119
      %p121 = scmp.ne.s32.totalorder %s112, %s113
      %p122 = scmp.eq.s32.totalorder %s18, 0
      %p123 = por %p121, %p122
      %p124 = scmp.ne.s32.totalorder %s112, %s113
      %p125 = scmp.eq.s32.totalorder %s19, 1
      %p126 = por %p124, %p125
      %p128 = scmp.ne.s32.totalorder %s113, %s127
      %p129 = scmp.eq.s32.totalorder %s19, 0
      %p130 = por %p128, %p129
      %s132 = sadd.s32 %s131, 1
      %p135 = scmp.eq.s32.totalorder %s13, 1
      %p136 = scmp.ne.s32.totalorder %s131, %s133
      %p137 = scmp.eq.s32.totalorder %s13, 0
      %p138 = por %p136, %p137
      %p139 = scmp.ne.s32.totalorder %s131, %s133
      %p140 = scmp.eq.s32.totalorder %s18, 1
      %p141 = por %p139, %p140
      %p142 = scmp.ne.s32.totalorder %s133, %s134
      %p143 = scmp.eq.s32.totalorder %s18, 0
      %p144 = por %p142, %p143
      %p145 = scmp.ne.s32.totalorder %s133, %s134
      %p146 = scmp.eq.s32.totalorder %s19, 1
      %p147 = por %p145, %p146
      %p149 = scmp.ne.s32.totalorder %s134, %s148
      %p150 = scmp.eq.s32.totalorder %s19, 0
      %p151 = por %p149, %p150
      %s153 = sadd.s32 %s152, 1
      %p156 = scmp.eq.s32.totalorder %s13, 1
      %p157 = scmp.ne.s32.totalorder %s152, %s154
      %p158 = scmp.eq.s32.totalorder %s13, 0
      %p159 = por %p157, %p158
      %p160 = scmp.ne.s32.totalorder %s152, %s154
      %p161 = scmp.eq.s32.totalorder %s18, 1
      %p162 = por %p160, %p161
      %p163 = scmp.ne.s32.totalorder %s154, %s155
      %p164 = scmp.eq.s32.totalorder %s18, 0
      %p165 = por %p163, %p164
      %p166 = scmp.ne.s32.totalorder %s154, %s155
      %p167 = scmp.eq.s32.totalorder %s19, 1
      %p168 = por %p166, %p167
      %p170 = scmp.ne.s32.totalorder %s155, %s169
      %p171 = scmp.eq.s32.totalorder %s19, 0
      %p172 = por %p170, %p171
      %s173 = ssub.s32 %s13, %s20
      %p174 = scmp.eq.s32.totalorder %s173, 0
      %s176 = sadd.s32 %s175, 1
      %s177 = scalar_select %p174, %s175, %s176
      %p180 = pneg %p174
      %p181 = scmp.eq.s32.totalorder %s13, 1
      %p182 = por %p180, %p181
      %p183 = scmp.ne.s32.totalorder %s175, %s178
      %p184 = scmp.eq.s32.totalorder %s13, 0
      %p185 = por %p183, %p184
      %p186 = scmp.ne.s32.totalorder %s175, %s178
      %p187 = scmp.eq.s32.totalorder %s18, 1
      %p188 = por %p186, %p187
      %p189 = scmp.ne.s32.totalorder %s178, %s179
      %p190 = scmp.eq.s32.totalorder %s18, 0
      %p191 = por %p189, %p190
      %p192 = scmp.ne.s32.totalorder %s178, %s179
      %p193 = scmp.eq.s32.totalorder %s19, 1
      %p194 = por %p192, %p193
      %p196 = scmp.ne.s32.totalorder %s179, %s195
      %p197 = scmp.eq.s32.totalorder %s19, 0
      %p198 = por %p196, %p197
      %p199 = scmp.le.s32.totalorder 1, %s13
      %p200 = scmp.lt.s32.totalorder %s13, 3
      %p201 = pnand %p199, %p200
      %p202 = pneg %p201
      // Predicated region
      $region9: #{tpu_custom_call.1} parent=5 // pred_check
        _
      $region10: #{tpu_custom_call.1} parent=5 // pred_check_branch
        %204 = sbr.rel (%p201) target = $region12
      $region11: #{tpu_custom_call.1} parent=5 // pred_region
        %s205 = ssub.s32 %s13, 1
        // Predicated region
        $region13: #{tpu_custom_call.1} parent=11 // pred_check
          %p206 = pneg %p60
        $region14: #{tpu_custom_call.1} parent=11 // pred_check_branch
          %208 = sbr.rel (%p206) target = $region16
        $region15: #{tpu_custom_call.1} parent=11 // pred_region
          _
        $region16: #{tpu_custom_call.1} parent=11 // pred_fallthru
          _
        // Predicated region
        $region17: #{tpu_custom_call.1} parent=11 // pred_check
          %p209 = pneg %p81
        $region18: #{tpu_custom_call.1} parent=11 // pred_check_branch
          %211 = sbr.rel (%p209) target = $region20
        $region19: #{tpu_custom_call.1} parent=11 // pred_region
          _
        $region20: #{tpu_custom_call.1} parent=11 // pred_fallthru
          _
        // Predicated region
        $region21: #{tpu_custom_call.1} parent=11 // pred_check
          %p212 = pneg %p102
        $region22: #{tpu_custom_call.1} parent=11 // pred_check_branch
          %214 = sbr.rel (%p212) target = $region24
        $region23: #{tpu_custom_call.1} parent=11 // pred_region
          _
        $region24: #{tpu_custom_call.1} parent=11 // pred_fallthru
          _
        // Predicated region
        $region25: #{tpu_custom_call.1} parent=11 // pred_check
          %p215 = pneg %p123
        $region26: #{tpu_custom_call.1} parent=11 // pred_check_branch
          %217 = sbr.rel (%p215) target = $region28
        $region27: #{tpu_custom_call.1} parent=11 // pred_region
          _
        $region28: #{tpu_custom_call.1} parent=11 // pred_fallthru
          _
        // Predicated region
        $region29: #{tpu_custom_call.1} parent=11 // pred_check
          %p218 = pneg %p144
        $region30: #{tpu_custom_call.1} parent=11 // pred_check_branch
          %220 = sbr.rel (%p218) target = $region32
        $region31: #{tpu_custom_call.1} parent=11 // pred_region
          _
        $region32: #{tpu_custom_call.1} parent=11 // pred_fallthru
          _
        // Predicated region
        $region33: #{tpu_custom_call.1} parent=11 // pred_check
          %p221 = pneg %p165
        $region34: #{tpu_custom_call.1} parent=11 // pred_check_branch
          %223 = sbr.rel (%p221) target = $region36
        $region35: #{tpu_custom_call.1} parent=11 // pred_region
          _
        $region36: #{tpu_custom_call.1} parent=11 // pred_fallthru
          _
      $region12: #{tpu_custom_call.1} parent=5 // pred_fallthru
        _
      %p224 = scmp.lt.s32.totalorder %s13, 2
      // Predicated region
      $region37: #{tpu_custom_call.1} parent=5 // pred_check
        %p225 = pneg %p224
      $region38: #{tpu_custom_call.1} parent=5 // pred_check_branch
        %227 = sbr.rel (%p225) target = $region40
      $region39: #{tpu_custom_call.1} parent=5 // pred_region
        // Predicated region
        $region41: #{tpu_custom_call.1} parent=39 // pred_check
          %p228 = pneg %p33
        $region42: #{tpu_custom_call.1} parent=39 // pred_check_branch
          %230 = sbr.rel (%p228) target = $region44
        $region43: #{tpu_custom_call.1} parent=39 // pred_region
          %s231 = smul.u32 2, %s13
          %s232 = ssub.s32 3, %s231
          %p233 = scmp.lt.s32.totalorder %s232, 2
          %s234 = scalar_select %p233, %s232, 2
          %s235 = smul.u32 128, %s234
          %p236 = scmp.lt.s32.totalorder %s231, 2
          %s237 = scalar_select %p236, %s231, 2
          %s238 = smul.addr %s237, 8
          %s239 = scalar_lea.vmem %s0, %s238
          %s240 = smul.u32 2, %s13
          %s241 = ssub.s32 3, %s240
          %p242 = scmp.lt.s32.totalorder %s241, 2
          %s243 = scalar_select %p242, %s241, 2
          %s244 = smul.u32 128, %s243
        $region44: #{tpu_custom_call.1} parent=39 // pred_fallthru
          _
      $region40: #{tpu_custom_call.1} parent=5 // pred_fallthru
        _
      %p245 = scmp.le.s32.totalorder 1, %s13
      %p246 = scmp.lt.s32.totalorder %s13, 3
      %p247 = pnand %p245, %p246
      %p248 = pneg %p247
      // Predicated region
      $region45: #{tpu_custom_call.1} parent=5 // pred_check
        _
      $region46: #{tpu_custom_call.1} parent=5 // pred_check_branch
        %250 = sbr.rel (%p247) target = $region48
      $region47: #{tpu_custom_call.1} parent=5 // pred_region
        %s251 = ssub.s32 %s13, 1
        %s252 = smul.u32 2, %s18
        %s253 = ssub.s32 3, %s252
        %p254 = scmp.lt.s32.totalorder %s253, 2
        %s255 = scalar_select %p254, %s253, 2
        %s256 = smul.u32 128, %s255
        %p257 = scmp.lt.s32.totalorder %s252, 2
        %s258 = scalar_select %p257, %s252, 2
        %s259 = smul.addr %s258, 8
        %s260 = scalar_lea.vmem %s0, %s259
        %p261 = pneg %p39
        %p262 = pneg %p36
        %p263 = pneg %p60
        %p264 = pneg %p57
        %p265 = pneg %p81
        %p266 = pneg %p78
        %p267 = pneg %p102
        %p268 = pneg %p99
        %p269 = pneg %p123
        %p270 = pneg %p120
        %p271 = pneg %p144
        %p272 = pneg %p141
        %p273 = pneg %p165
        %p274 = pneg %p162
        %p275 = pneg %p191
        %p276 = pneg %p188
        %s277 = sand.u32 %s178, 1
        %s278 = sand.u32 %s178, 1
        %s279 = smul.addr %s278, 16
        %s280 = scalar_lea.vmem [#allocation2], %s279
        %s281 = smul.u32 2, %s18
        %s282 = ssub.s32 3, %s281
        %p283 = scmp.lt.s32.totalorder %s282, 2
        %s284 = scalar_select %p283, %s282, 2
        %s285 = smul.u32 128, %s284
        %p286 = scmp.lt.s32.totalorder %s281, 2
        %s287 = scalar_select %p286, %s281, 2
        %s288 = smul.addr %s287, 8
        %s289 = scalar_lea.vmem %s0, %s288
        %s290 = smul.u32 2, %s18
        %s291 = ssub.s32 3, %s290
        %p292 = scmp.lt.s32.totalorder %s291, 2
        %s293 = scalar_select %p292, %s291, 2
        %s294 = smul.u32 128, %s293
        %s295 = smul.u32 2, %s18
        %s296 = ssub.s32 3, %s295
        %p297 = scmp.lt.s32.totalorder %s296, 2
        %s298 = scalar_select %p297, %s296, 2
        %s299 = smul.u32 128, %s298
        %v301 = vld [vmem:[%s289] sm:$0xff]
        %v302 = vld [vmem:[%s289 + $0x8] sm:$0xff]
        %v303 = vpack.c.bf16 %v302, %v301
        %v304 = vld [vmem:[%s1] sm:$0xff]
        %v305 = vld [vmem:[%s1 + $0x8] sm:$0xff]
        %v306 = vld [vmem:[%s1 + $0x10] sm:$0xff]
        %v307 = vld [vmem:[%s1 + $0x18] sm:$0xff]
        %v308 = vpack.c.bf16 %v305, %v304
        %v309 = vpack.c.bf16 %v307, %v306
        %v310 = vld [vmem:[%s2] sm:$0x1]
        %v312 = vlaneseq
        %v313 = vshrl.u32 %v312, 7
        %v314 = vsub.s32 0, %v313
        %v315 = vrot.slane %v310, %v314
        %vm317 = vcmask 261120
        %v319 = vsel %vm317, %v303, 0
        %321 = vmatprep.subr.bf16.mxu0 0
        %322 = vmatpush1.bf16.msra.mxu0 %v308
        %323 = vmatprep.subr.bf16.mxu0 0
        %324 = vmatpush1.bf16.msra.mxu0 %v309
        %325 = vmatprep.subr.bf16.mxu0 0
        %326 = vmatpush1.bf16.msra.mxu0 0
        %327 = vmatprep.subr.bf16.mxu0 0
        %328 = vmatpush1.bf16.msra.mxu0 0
        %329 = vmatprep.subr.bf16.mxu0 0
        %330 = vmatpush1.bf16.msra.mxu0 0
        %331 = vmatprep.subr.bf16.mxu0 0
        %332 = vmatpush1.bf16.msra.mxu0 0
        %333 = vmatprep.subr.bf16.mxu0 0
        %334 = vmatpush1.bf16.msra.mxu0 0
        %335 = vmatprep.subr.bf16.mxu0 0
        %336 = vmatpush1.bf16.msra.mxu0 0
        %337 = vmatprep.subr.bf16.mxu0 0
        %338 = vmatpush1.bf16.msra.mxu0 0
        %339 = vmatprep.subr.bf16.mxu0 0
        %340 = vmatpush1.bf16.msra.mxu0 0
        %341 = vmatprep.subr.bf16.mxu0 0
        %342 = vmatpush1.bf16.msra.mxu0 0
        %343 = vmatprep.subr.bf16.mxu0 0
        %344 = vmatpush1.bf16.msra.mxu0 0
        %345 = vmatprep.subr.bf16.mxu0 0
        %346 = vmatpush1.bf16.msra.mxu0 0
        %347 = vmatprep.subr.bf16.mxu0 0
        %348 = vmatpush1.bf16.msra.mxu0 0
        %349 = vmatprep.subr.bf16.mxu0 0
        %350 = vmatpush1.bf16.msra.mxu0 0
        %351 = vmatprep.subr.bf16.mxu0 0
        %352 = vmatpush1.bf16.msra.mxu0 0
        %353 = vmatprep.mubr.bf16.mxu0 0
        %354 = vmatmul.mubr.bf16.gmra.mrb[0].mxu0 %v319
        %v355 = vpop.f32.mrb[0].mxu0
        %v356 = vadd.f32 %v315, %v355
        %v357 = vpop.f32.mrb[0].mxu0
        %v358 = vpop.f32.mrb[0].mxu0
        %v359 = vadd.f32 %v315, %v358
        %v360 = vpop.f32.mrb[0].mxu0
        %361 = vdwg.mxu0
        %v362 = vmax.f32 %v356, 0.0
        %v363 = vmax.f32 %v359, 0.0
        %v364 = vpack.c.bf16 %v363, %v362
        %v365 = vld [vmem:[%s3] sm:$0xff]
        %v366 = vld [vmem:[%s3 + $0x8] sm:$0xff]
        %v367 = vpack.c.bf16 %v366, %v365
        %v368 = vld [vmem:[%s4] sm:$0x1]
        %v370 = vlaneseq
        %v371 = vshrl.u32 %v370, 7
        %v372 = vsub.s32 0, %v371
        %v373 = vrot.slane %v368, %v372
        %vm375 = vcmask 130048
        %v377 = vsel %vm375, %v364, 0
        %379 = vmatprep.subr.bf16.mxu0 0
        %380 = vmatpush1.bf16.msra.mxu0 %v367
        %381 = vmatprep.subr.bf16.mxu0 0
        %382 = vmatpush1.bf16.msra.mxu0 0
        %383 = vmatprep.subr.bf16.mxu0 0
        %384 = vmatpush1.bf16.msra.mxu0 0
        %385 = vmatprep.subr.bf16.mxu0 0
        %386 = vmatpush1.bf16.msra.mxu0 0
        %387 = vmatprep.subr.bf16.mxu0 0
        %388 = vmatpush1.bf16.msra.mxu0 0
        %389 = vmatprep.subr.bf16.mxu0 0
        %390 = vmatpush1.bf16.msra.mxu0 0
        %391 = vmatprep.subr.bf16.mxu0 0
        %392 = vmatpush1.bf16.msra.mxu0 0
        %393 = vmatprep.subr.bf16.mxu0 0
        %394 = vmatpush1.bf16.msra.mxu0 0
        %395 = vmatprep.subr.bf16.mxu0 0
        %396 = vmatpush1.bf16.msra.mxu0 0
        %397 = vmatprep.subr.bf16.mxu0 0
        %398 = vmatpush1.bf16.msra.mxu0 0
        %399 = vmatprep.subr.bf16.mxu0 0
        %400 = vmatpush1.bf16.msra.mxu0 0
        %401 = vmatprep.subr.bf16.mxu0 0
        %402 = vmatpush1.bf16.msra.mxu0 0
        %403 = vmatprep.subr.bf16.mxu0 0
        %404 = vmatpush1.bf16.msra.mxu0 0
        %405 = vmatprep.subr.bf16.mxu0 0
        %406 = vmatpush1.bf16.msra.mxu0 0
        %407 = vmatprep.subr.bf16.mxu0 0
        %408 = vmatpush1.bf16.msra.mxu0 0
        %409 = vmatprep.subr.bf16.mxu0 0
        %410 = vmatpush1.bf16.msra.mxu0 0
        %411 = vmatprep.mubr.bf16.mxu0 0
        %412 = vmatmul.mubr.bf16.gmra.mrb[0].mxu0 %v377
        %v413 = vpop.f32.mrb[0].mxu0
        %v414 = vadd.f32 %v373, %v413
        %v415 = vpop.f32.mrb[0].mxu0
        %v416 = vpop.f32.mrb[0].mxu0
        %v417 = vadd.f32 %v373, %v416
        %v418 = vpop.f32.mrb[0].mxu0
        %419 = vdwg.mxu0
        %v420 = vmax.f32 %v414, 0.0
        %v421 = vmax.f32 %v417, 0.0
        %v422 = vpack.c.bf16 %v421, %v420
        %v423 = vld [vmem:[%s5] sm:$0xf]
        %v424 = vpack.c.bf16 %v423, %v423
        %v425 = vld [vmem:[%s6] sm:$0x1]
        %v427 = vlaneseq
        %v428 = vshrl.u32 %v427, 7
        %v429 = vsub.s32 0, %v428
        %v430 = vrot.slane %v425, %v429
        %vm432 = vcmask 31744
        %v434 = vsel %vm432, %v422, 0
        %vm436 = vcmask 1041408
        %v438 = vsel %vm436, %v424, 0
        %440 = vmatprep.subr.bf16.mxu0 0
        %441 = vmatpush1.bf16.msra.mxu0 %v438
        %442 = vmatprep.subr.bf16.mxu0 0
        %443 = vmatpush1.bf16.msra.mxu0 0
        %444 = vmatprep.subr.bf16.mxu0 0
        %445 = vmatpush1.bf16.msra.mxu0 0
        %446 = vmatprep.subr.bf16.mxu0 0
        %447 = vmatpush1.bf16.msra.mxu0 0
        %448 = vmatprep.subr.bf16.mxu0 0
        %449 = vmatpush1.bf16.msra.mxu0 0
        %450 = vmatprep.subr.bf16.mxu0 0
        %451 = vmatpush1.bf16.msra.mxu0 0
        %452 = vmatprep.subr.bf16.mxu0 0
        %453 = vmatpush1.bf16.msra.mxu0 0
        %454 = vmatprep.subr.bf16.mxu0 0
        %455 = vmatpush1.bf16.msra.mxu0 0
        %456 = vmatprep.subr.bf16.mxu0 0
        %457 = vmatpush1.bf16.msra.mxu0 0
        %458 = vmatprep.subr.bf16.mxu0 0
        %459 = vmatpush1.bf16.msra.mxu0 0
        %460 = vmatprep.subr.bf16.mxu0 0
        %461 = vmatpush1.bf16.msra.mxu0 0
        %462 = vmatprep.subr.bf16.mxu0 0
        %463 = vmatpush1.bf16.msra.mxu0 0
        %464 = vmatprep.subr.bf16.mxu0 0
        %465 = vmatpush1.bf16.msra.mxu0 0
        %466 = vmatprep.subr.bf16.mxu0 0
        %467 = vmatpush1.bf16.msra.mxu0 0
        %468 = vmatprep.subr.bf16.mxu0 0
        %469 = vmatpush1.bf16.msra.mxu0 0
        %470 = vmatprep.subr.bf16.mxu0 0
        %471 = vmatpush1.bf16.msra.mxu0 0
        %472 = vmatprep.mubr.bf16.mxu0 0
        %473 = vmatmul.mubr.bf16.gmra.mrb[0].mxu0 %v434
        %v474 = vpop.f32.mrb[0].mxu0
        %v475 = vadd.f32 %v430, %v474
        %v476 = vpop.f32.mrb[0].mxu0
        %v477 = vpop.f32.mrb[0].mxu0
        %v478 = vadd.f32 %v430, %v477
        %v479 = vpop.f32.mrb[0].mxu0
        %480 = vdwg.mxu0
        %vm481 = vcmask 15360
        %482 = vst.msk [vmem:[%s280] sm:$0xff] %vm481, %v475
        %483 = vst.msk [vmem:[%s280 + $0x8] sm:$0xff] %vm481, %v478
        %s484 = sand.u32 %s178, 1
        %s485 = sand.u32 %s178, 1
        %s486 = smul.addr %s485, 16
        %s487 = scalar_lea.vmem [#allocation2], %s486
        // Predicated region
        $region49: #{tpu_custom_call.1} parent=47 // pred_check
          %p488 = pneg %p188
        $region50: #{tpu_custom_call.1} parent=47 // pred_check_branch
          %490 = sbr.rel (%p488) target = $region52
        $region51: #{tpu_custom_call.1} parent=47 // pred_region
          %s491 = smul.u32 2, %s18
          %s492 = ssub.s32 3, %s491
          %p493 = scmp.lt.s32.totalorder %s492, 2
          %s494 = scalar_select %p493, %s492, 2
          %s495 = smul.u32 128, %s494
          %p496 = scmp.ne.s32.totalorder 0, %s495
          %s497 = smul.addr %s491, 8
          %s498 = scalar_lea.vmem %s7, %s497
          // Predicated region
          $region53: #{tpu_custom_call.1} parent=51 // pred_check
            %p499 = pneg %p496
          $region54: #{tpu_custom_call.1} parent=51 // pred_check_branch
            %501 = sbr.rel (%p499) target = $region56
          $region55: #{tpu_custom_call.1} parent=51 // pred_region
            // Predicated region
            $region57: #{tpu_custom_call.1} parent=55 // pred_check
              _
            $region58: #{tpu_custom_call.1} parent=55 // pred_check_branch
              %503 = sbr.rel (0) target = $region60
            $region59: #{tpu_custom_call.1} parent=55 // pred_region
              // Predicated region
              $region79: #{tpu_custom_call.1} parent=59 // pred_check
                _
              $region80: #{tpu_custom_call.1} parent=59 // pred_check_branch
                %554 = sbr.rel (0) target = $region82
              $region81: #{tpu_custom_call.1} parent=59 // pred_region
                %s555 = sshrl.u32 %s494, 1
                // While loop
                $region83: #{tpu_custom_call.1} parent=81 // loop_pre_header
                  _
                $region84: #{tpu_custom_call.1} parent=81 // loop_header
                  %s557 = sphi 0, %s559
                  %p558 = scmp.ge.s32.totalorder %s557, %s555
                  %s562 = sphi 0, %s571
                  %s563 = sphi %s487, %s574
                  %s564 = sphi %s498, %s575
                $region85: #{tpu_custom_call.1} parent=81 // loop_header_branch
                  %561 = sbr.rel (%p558) target = $region89
                $region86: #{tpu_custom_call.1} parent=81 // loop_body
                  %v565 = vld [vmem:[%s563] sm:$0xff]
                  %566 = vst [vmem:[%s564] sm:$0xff] %v565
                  %v567 = vld [vmem:[%s563 + $0x8] sm:$0xff]
                  %568 = vst [vmem:[%s564 + $0x8] sm:$0xff] %v567
                  %s569 = sadd.s32 1, %s562
                  %p570 = scmp.ge.s32.totalorder %s569, %s555
                  %s571 = scalar_select %p570, 0, %s569
                  %s572 = smul.u32 %s571, 16
                  %s573 = smul.u32 %s571, 16
                  %s574 = scalar_lea.vmem %s487, %s572 [#allocation2]
                  %s575 = scalar_lea.vmem %s498, %s573
                $region87: #{tpu_custom_call.1} parent=81 // loop_footer
                  %s559 = sadd.s32 %s557, 1
                $region88: #{tpu_custom_call.1} parent=81 // loop_footer_branch
                  %556 = sbr.rel target = $region84
                $region89: #{tpu_custom_call.1} parent=81 // loop_exit
                  _
                %s576 = sshrl.u32 %s494, 1
                %s577 = sand.u32 %s494, 1
                %s578 = smul.u32 %s576, 2
                %s579 = smul.u32 8, %s578
                %s580 = scalar_lea.vmem %s487, %s579 [#allocation2]
                %s581 = smul.u32 8, %s578
                %s582 = scalar_lea.vmem %s498, %s581
                // While loop
                $region90: #{tpu_custom_call.1} parent=81 // loop_pre_header
                  _
                $region91: #{tpu_custom_call.1} parent=81 // loop_header
                  %s584 = sphi 0, %s586
                  %p585 = scmp.ge.s32.totalorder %s584, %s577
                  %s589 = sphi 0, %s596
                  %s590 = sphi %s580, %s599
                  %s591 = sphi %s582, %s600
                $region92: #{tpu_custom_call.1} parent=81 // loop_header_branch
                  %588 = sbr.rel (%p585) target = $region96
                $region93: #{tpu_custom_call.1} parent=81 // loop_body
                  %v592 = vld [vmem:[%s590] sm:$0xff]
                  %593 = vst [vmem:[%s591] sm:$0xff] %v592
                  %s594 = sadd.s32 1, %s589
                  %p595 = scmp.ge.s32.totalorder %s594, %s577
                  %s596 = scalar_select %p595, 0, %s594
                  %s597 = smul.u32 %s596, 8
                  %s598 = smul.u32 %s596, 8
                  %s599 = scalar_lea.vmem %s580, %s597 [#allocation2]
                  %s600 = scalar_lea.vmem %s582, %s598
                $region94: #{tpu_custom_call.1} parent=81 // loop_footer
                  %s586 = sadd.s32 %s584, 1
                $region95: #{tpu_custom_call.1} parent=81 // loop_footer_branch
                  %583 = sbr.rel target = $region91
                $region96: #{tpu_custom_call.1} parent=81 // loop_exit
                  _
              $region82: #{tpu_custom_call.1} parent=59 // pred_fallthru
                _
              // Predicated region
              $region97: #{tpu_custom_call.1} parent=59 // pred_check
                _
              $region98: #{tpu_custom_call.1} parent=59 // pred_check_branch
                %602 = sbr.rel target = $region100
              $region99: #{tpu_custom_call.1} parent=59 // pred_region
                _
              $region100: #{tpu_custom_call.1} parent=59 // pred_fallthru
                _
            $region60: #{tpu_custom_call.1} parent=55 // pred_fallthru
              _
            // Predicated region
            $region61: #{tpu_custom_call.1} parent=55 // pred_check
              _
            $region62: #{tpu_custom_call.1} parent=55 // pred_check_branch
              %505 = sbr.rel target = $region64
            $region63: #{tpu_custom_call.1} parent=55 // pred_region
              %s507 = sshrl.u32 %s494, 1
              // While loop
              $region65: #{tpu_custom_call.1} parent=63 // loop_pre_header
                _
              $region66: #{tpu_custom_call.1} parent=63 // loop_header
                %s509 = sphi 0, %s511
                %p510 = scmp.ge.s32.totalorder %s509, %s507
                %s514 = sphi 0, %s523
                %s515 = sphi %s487, %s526
                %s516 = sphi %s498, %s527
              $region67: #{tpu_custom_call.1} parent=63 // loop_header_branch
                %513 = sbr.rel (%p510) target = $region71
              $region68: #{tpu_custom_call.1} parent=63 // loop_body
                %v517 = vld [vmem:[%s515] sm:$0xff]
                %518 = vst [vmem:[%s516] sm:$0xff] %v517
                %v519 = vld [vmem:[%s515 + $0x8] sm:$0xff]
                %520 = vst [vmem:[%s516 + $0x8] sm:$0xff] %v519
                %s521 = sadd.s32 1, %s514
                %p522 = scmp.ge.s32.totalorder %s521, %s507
                %s523 = scalar_select %p522, 0, %s521
                %s524 = smul.u32 %s523, 16
                %s525 = smul.u32 %s523, 16
                %s526 = scalar_lea.vmem %s487, %s524 [#allocation2]
                %s527 = scalar_lea.vmem %s498, %s525
              $region69: #{tpu_custom_call.1} parent=63 // loop_footer
                %s511 = sadd.s32 %s509, 1
              $region70: #{tpu_custom_call.1} parent=63 // loop_footer_branch
                %508 = sbr.rel target = $region66
              $region71: #{tpu_custom_call.1} parent=63 // loop_exit
                _
              %s528 = sshrl.u32 %s494, 1
              %s529 = sand.u32 %s494, 1
              %s530 = smul.u32 %s528, 2
              %s531 = smul.u32 8, %s530
              %s532 = scalar_lea.vmem %s487, %s531 [#allocation2]
              %s533 = smul.u32 8, %s530
              %s534 = scalar_lea.vmem %s498, %s533
              // While loop
              $region72: #{tpu_custom_call.1} parent=63 // loop_pre_header
                _
              $region73: #{tpu_custom_call.1} parent=63 // loop_header
                %s536 = sphi 0, %s538
                %p537 = scmp.ge.s32.totalorder %s536, %s529
                %s541 = sphi 0, %s548
                %s542 = sphi %s532, %s551
                %s543 = sphi %s534, %s552
              $region74: #{tpu_custom_call.1} parent=63 // loop_header_branch
                %540 = sbr.rel (%p537) target = $region78
              $region75: #{tpu_custom_call.1} parent=63 // loop_body
                %v544 = vld [vmem:[%s542] sm:$0xff]
                %545 = vst [vmem:[%s543] sm:$0xff] %v544
                %s546 = sadd.s32 1, %s541
                %p547 = scmp.ge.s32.totalorder %s546, %s529
                %s548 = scalar_select %p547, 0, %s546
                %s549 = smul.u32 %s548, 8
                %s550 = smul.u32 %s548, 8
                %s551 = scalar_lea.vmem %s532, %s549 [#allocation2]
                %s552 = scalar_lea.vmem %s534, %s550
              $region76: #{tpu_custom_call.1} parent=63 // loop_footer
                %s538 = sadd.s32 %s536, 1
              $region77: #{tpu_custom_call.1} parent=63 // loop_footer_branch
                %535 = sbr.rel target = $region73
              $region78: #{tpu_custom_call.1} parent=63 // loop_exit
                _
            $region64: #{tpu_custom_call.1} parent=55 // pred_fallthru
              _
          $region56: #{tpu_custom_call.1} parent=51 // pred_fallthru
            _
          %603 = vnop
        $region52: #{tpu_custom_call.1} parent=47 // pred_fallthru
          _
      $region48: #{tpu_custom_call.1} parent=5 // pred_fallthru
        _
      %p604 = scmp.le.s32.totalorder 2, %s13
      // Predicated region
      $region101: #{tpu_custom_call.1} parent=5 // pred_check
        %p605 = pneg %p604
      $region102: #{tpu_custom_call.1} parent=5 // pred_check_branch
        %607 = sbr.rel (%p605) target = $region104
      $region103: #{tpu_custom_call.1} parent=5 // pred_region
        %s608 = ssub.s32 %s13, 2
        // Predicated region
        $region105: #{tpu_custom_call.1} parent=103 // pred_check
          %p609 = pneg %p194
        $region106: #{tpu_custom_call.1} parent=103 // pred_check_branch
          %611 = sbr.rel (%p609) target = $region108
        $region107: #{tpu_custom_call.1} parent=103 // pred_region
          %s612 = sand.u32 %s179, 1
          %s613 = sand.u32 %s179, 1
          %s614 = smul.addr %s613, 16
          %s615 = scalar_lea.vmem [#allocation2], %s614
        $region108: #{tpu_custom_call.1} parent=103 // pred_fallthru
          _
      $region104: #{tpu_custom_call.1} parent=5 // pred_fallthru
        _
    $region6: #{tpu_custom_call.1} parent=1 // loop_footer
      %s17 = sadd.s32 1, %s13
    $region7: #{tpu_custom_call.1} parent=1 // loop_footer_branch
      %12 = sbr.rel target = $region3
    $region8: #{tpu_custom_call.1} parent=1 // loop_exit
      _

</llo_original>
